<compile_context>
chip_gen: v6e
topology: v6e:2x2x1
jax: 0.10.0
libtpu: 0.0.40
codegen_flags: <defaults>
</compile_context>

<pallas_src>
import math
from functools import partial

import jax
import jax.numpy as jnp
from jax.experimental import pallas as pl
from jax.experimental.pallas import tpu as pltpu

_GELU_C = math.sqrt(2.0 / math.pi)


def _round_up(n: int, m: int) -> int:
    return (n + m - 1) // m * m


def _bf16_elementwise_ok() -> bool:
    """bf16 VPU/EUP exists on v6e/v7x but not on v5e and older."""
    try:
        kind = jax.devices()[0].device_kind.lower()
    except Exception:
        return False
    return not any(tag in kind for tag in ("v2", "v3", "v4", "v5"))


def _mlp_kernel(x_ref, w1_ref, b1_ref, w2_ref, b2_ref, out_ref, *, gelu_dtype):
    # x_ref: (TM, d_p) in the input dtype; w1: (d_p, i_p) bf16; b1: (1, i_p) f32
    # w2: (i_p, d_p) bf16; b2: (1, d_p) f32; out: (TM, d_p) in input dtype.

    # dense_1: bf16 operands on the MXU, f32 accumulate, f32 bias add.
    x = x_ref[...].astype(jnp.bfloat16)
    h = jnp.dot(x, w1_ref[...], preferred_element_type=jnp.float32) + b1_ref[...]

    # NewGELUActivation: 0.5*h*(1 + tanh(sqrt(2/pi)*(h + 0.044715*h^3)))
    # (tanh -> EUP, polynomial -> VPU; bf16 on v6e/v7x, f32 on v5e).
    h = h.astype(gelu_dtype)
    g = 0.5 * h * (1.0 + jnp.tanh(_GELU_C * (h + 0.044715 * (h * h * h))))

    # dense_2: bf16 operands on the MXU, f32 accumulate, f32 bias add.
    out = jnp.dot(g.astype(jnp.bfloat16), w2_ref[...],
                  preferred_element_type=jnp.float32) + b2_ref[...]

    # dropout is identity in eval mode / p=0.
    out_ref[...] = out.astype(out_ref.dtype)


def mlp(x, w1, b1, w2, b2, *, block_m=256):
    """x: (..., d_model); w1: (d_model, inter); b1: (inter,);
    w2: (inter, d_model); b2: (d_model,).  Returns (..., d_model)."""
    orig_shape = x.shape
    d_model = orig_shape[-1]
    inter = w1.shape[-1]
    out_dtype = x.dtype

    # Flatten all leading dims into a single token axis.
    x2 = x.reshape(-1, d_model)
    n_tok = x2.shape[0]

    # --- Lane-dense feature dims (no-op for production CLIP widths). ---------
    d_p = _round_up(max(d_model, 128), 128)
    i_p = _round_up(max(inter, 128), 128)
    if d_p != d_model:
        x2 = jnp.pad(x2, ((0, 0), (0, d_p - d_model)))
        w1 = jnp.pad(w1, ((0, d_p - d_model), (0, 0)))
        w2 = jnp.pad(w2, ((0, 0), (0, d_p - d_model)))
        b2 = jnp.pad(b2, ((0, d_p - d_model),))
    if i_p != inter:
        w1 = jnp.pad(w1, ((0, 0), (0, i_p - inter)))
        b1 = jnp.pad(b1, ((0, i_p - inter),))
        w2 = jnp.pad(w2, ((0, i_p - inter), (0, 0)))

    # bf16 matmul operands (in a real model the weights would be stored bf16).
    w1_bf = w1.astype(jnp.bfloat16)
    w2_bf = w2.astype(jnp.bfloat16)
    b1_2d = b1.reshape(1, i_p).astype(jnp.float32)
    b2_2d = b2.reshape(1, d_p).astype(jnp.float32)

    # --- Token tiling. --------------------------------------------------------
    # Short inputs: one grid step with an 8-aligned tile (weights are resident,
    # nothing to pipeline; extra steps only add ~600-cycle overhead each).
    # Long inputs: block_m-row tiles; ragged boundary block instead of jnp.pad.
    if n_tok <= block_m:
        bm = max(8, _round_up(n_tok, 8))
    else:
        bm = block_m
    grid = (pl.cdiv(n_tok, bm),)

    # --- Scoped-VMEM budget: resident bf16 weights (single-buffered) +
    # double-buffered x/out tiles + f32 hidden/GELU intermediate headroom. ----
    x_item = jnp.dtype(out_dtype).itemsize
    est = (
        2 * d_p * i_p * 2                    # W1 + W2, bf16, Buffered(1)
        + (i_p + d_p) * 4 * 2                # biases, f32 (tiny)
        + 2 * 2 * bm * d_p * x_item          # x + out tiles, double-buffered
        + 2 * bm * i_p * 4                   # f32 hidden + GELU temporaries
    )
    vmem_limit = min(64 << 20, max(32 << 20, int(est * 1.5)))

    kernel = partial(
        _mlp_kernel,
        gelu_dtype=jnp.bfloat16 if _bf16_elementwise_ok() else jnp.float32,
    )

    out2 = pl.pallas_call(
        kernel,
        out_shape=jax.ShapeDtypeStruct((n_tok, d_p), out_dtype),
        grid_spec=pltpu.PrefetchScalarGridSpec(
            num_scalar_prefetch=0,
            grid=grid,
            in_specs=[
                # Streaming token tile (default double-buffered pipeline).
                pl.BlockSpec((bm, d_p), lambda i: (i, 0)),
                # Weights / biases: constant index_map -> fetched once, and
                # Buffered(1) drops the useless second buffer.
                pl.BlockSpec((d_p, i_p), lambda i: (0, 0),
                             pipeline_mode=pl.Buffered(1)),
                pl.BlockSpec((1, i_p), lambda i: (0, 0),
                             pipeline_mode=pl.Buffered(1)),
                pl.BlockSpec((i_p, d_p), lambda i: (0, 0),
                             pipeline_mode=pl.Buffered(1)),
                pl.BlockSpec((1, d_p), lambda i: (0, 0),
                             pipeline_mode=pl.Buffered(1)),
            ],
            out_specs=pl.BlockSpec((bm, d_p), lambda i: (i, 0)),
        ),
        compiler_params=pltpu.CompilerParams(
            dimension_semantics=("parallel",),
            vmem_limit_bytes=vmem_limit,
        ),
    )(x2, w1_bf, b1_2d, w2_bf, b2_2d)

    if d_p != d_model:
        out2 = out2[:, :d_model]
    return out2.reshape(orig_shape)


def _reference(x, w1, b1, w2, b2):
    h = x @ w1 + b1
    g = 0.5 * h * (1.0 + jnp.tanh(_GELU_C * (h + 0.044715 * jnp.power(h, 3.0))))
    return g @ w2 + b2


if __name__ == "__main__":
    # Small shapes consistent with the module: d_model=32, mlp_ratio=4 -> inter=128.
    B, S, d_model, mlp_ratio = 2, 8, 32, 4
    inter = mlp_ratio * d_model

    key = jax.random.PRNGKey(0)
    kx, kw1, kb1, kw2, kb2 = jax.random.split(key, 5)

    x = jax.random.normal(kx, (B, S, d_model), dtype=jnp.float32)

    # PyTorch nn.Linear-style uniform init; weights stored as (in, out) so the
    # kernel's x @ W + b matches PyTorch's x @ W.T + b with W=(out, in).
    lim1 = 1.0 / math.sqrt(d_model)
    w1 = jax.random.uniform(kw1, (d_model, inter), jnp.float32, -lim1, lim1)
    b1 = jax.random.uniform(kb1, (inter,), jnp.float32, -lim1, lim1)
    lim2 = 1.0 / math.sqrt(inter)
    w2 = jax.random.uniform(kw2, (inter, d_model), jnp.float32, -lim2, lim2)
    b2 = jax.random.uniform(kb2, (d_model,), jnp.float32, -lim2, lim2)

    out = mlp(x, w1, b1, w2, b2)
    out = jax.block_until_ready(out)

    ref = _reference(x, w1, b1, w2, b2)
    assert out.shape == ref.shape
    # bf16 MXU operands (f32 accumulate) vs. the f32 reference -> loosened tol.
    assert jnp.allclose(out, ref, atol=2e-2, rtol=2e-2)

    print("KERNEL_OK")
</pallas_src>

<mosaic_0001>
module attributes {stable_mosaic.version = 11 : i64} {
  func.func @_mlp_kernel(%arg0: i32, %arg1: memref<16x128xf32, #tpu.memory_space<vmem>>, %arg2: memref<128x128xbf16, #tpu.memory_space<vmem>>, %arg3: memref<1x128xf32, #tpu.memory_space<vmem>>, %arg4: memref<128x128xbf16, #tpu.memory_space<vmem>>, %arg5: memref<1x128xf32, #tpu.memory_space<vmem>>, %arg6: memref<16x128xf32, #tpu.memory_space<vmem>>) attributes {dimension_semantics = [#tpu.dimension_semantics<parallel>], iteration_bounds = array<i64: 1>, scalar_prefetch = 0 : i64, scratch_operands = 0 : i64, tpu.core_type = #tpu.core_type<tc>, window_params = [{transform_indices = @transform_0, window_bounds = array<i64: 16, 128>}, {pipeline_mode = #tpu.pipeline_mode<synchronous>, transform_indices = @transform_1, window_bounds = array<i64: 128, 128>}, {pipeline_mode = #tpu.pipeline_mode<synchronous>, transform_indices = @transform_2, window_bounds = array<i64: 1, 128>}, {pipeline_mode = #tpu.pipeline_mode<synchronous>, transform_indices = @transform_3, window_bounds = array<i64: 128, 128>}, {pipeline_mode = #tpu.pipeline_mode<synchronous>, transform_indices = @transform_4, window_bounds = array<i64: 1, 128>}, {transform_indices = @transform_5, window_bounds = array<i64: 16, 128>}]} {
    %c0 = arith.constant 0 : index
    %c0_0 = arith.constant 0 : index
    %0 = vector.load %arg1[%c0, %c0_0] : memref<16x128xf32, #tpu.memory_space<vmem>>, vector<16x128xf32>
    %1 = arith.truncf %0 : vector<16x128xf32> to vector<16x128xbf16>
    %c0_1 = arith.constant 0 : index
    %c0_2 = arith.constant 0 : index
    %2 = vector.load %arg2[%c0_1, %c0_2] : memref<128x128xbf16, #tpu.memory_space<vmem>>, vector<128x128xbf16>
    %cst = arith.constant dense<0.000000e+00> : vector<16x128xf32>
    %3 = tpu.matmul %1, %2, %cst {dimension_numbers = #tpu.dot_dimension_numbers<[1], [0], [0], [1], [0, 0, 1, 1], [], []>} : vector<16x128xbf16>, vector<128x128xbf16>, vector<16x128xf32> -> vector<16x128xf32>
    %c0_3 = arith.constant 0 : index
    %c0_4 = arith.constant 0 : index
    %4 = vector.load %arg3[%c0_3, %c0_4] : memref<1x128xf32, #tpu.memory_space<vmem>>, vector<1x128xf32>
    %5 = vector.broadcast %4 : vector<1x128xf32> to vector<16x128xf32>
    %6 = arith.addf %3, %5 : vector<16x128xf32>
    %7 = arith.truncf %6 : vector<16x128xf32> to vector<16x128xbf16>
    %cst_5 = arith.constant 5.000000e-01 : bf16
    %8 = vector.broadcast %cst_5 : bf16 to vector<16x128xbf16>
    %9 = arith.mulf %8, %7 : vector<16x128xbf16>
    %10 = arith.mulf %7, %7 : vector<16x128xbf16>
    %11 = arith.mulf %10, %7 : vector<16x128xbf16>
    %cst_6 = arith.constant 4.467770e-02 : bf16
    %12 = vector.broadcast %cst_6 : bf16 to vector<16x128xbf16>
    %13 = arith.mulf %12, %11 : vector<16x128xbf16>
    %14 = arith.addf %7, %13 : vector<16x128xbf16>
    %cst_7 = arith.constant 7.968750e-01 : bf16
    %15 = vector.broadcast %cst_7 : bf16 to vector<16x128xbf16>
    %16 = arith.mulf %15, %14 : vector<16x128xbf16>
    %17 = math.tanh %16 : vector<16x128xbf16>
    %cst_8 = arith.constant 1.000000e+00 : bf16
    %18 = vector.broadcast %cst_8 : bf16 to vector<16x128xbf16>
    %19 = arith.addf %18, %17 : vector<16x128xbf16>
    %20 = arith.mulf %9, %19 : vector<16x128xbf16>
    %c0_9 = arith.constant 0 : index
    %c0_10 = arith.constant 0 : index
    %21 = vector.load %arg4[%c0_9, %c0_10] : memref<128x128xbf16, #tpu.memory_space<vmem>>, vector<128x128xbf16>
    %cst_11 = arith.constant dense<0.000000e+00> : vector<16x128xf32>
    %22 = tpu.matmul %20, %21, %cst_11 {dimension_numbers = #tpu.dot_dimension_numbers<[1], [0], [0], [1], [0, 0, 1, 1], [], []>} : vector<16x128xbf16>, vector<128x128xbf16>, vector<16x128xf32> -> vector<16x128xf32>
    %c0_12 = arith.constant 0 : index
    %c0_13 = arith.constant 0 : index
    %23 = vector.load %arg5[%c0_12, %c0_13] : memref<1x128xf32, #tpu.memory_space<vmem>>, vector<1x128xf32>
    %24 = vector.broadcast %23 : vector<1x128xf32> to vector<16x128xf32>
    %25 = arith.addf %22, %24 : vector<16x128xf32>
    %c0_14 = arith.constant 0 : index
    %c0_15 = arith.constant 0 : index
    %26 = vector.load %arg6[%c0_14, %c0_15] : memref<16x128xf32, #tpu.memory_space<vmem>>, vector<16x128xf32>
    tpu.vector_store %arg6[%c0_14, %c0_15], %25 {strides = array<i32>} : memref<16x128xf32, #tpu.memory_space<vmem>>, vector<16x128xf32>,
    return
  }
  func.func @transform_0(%arg0: i32) -> (i32, i32) {
    %c0_i32 = arith.constant 0 : i32
    %c0_i32_0 = arith.constant 0 : i32
    return %arg0, %c0_i32 : i32, i32
  }
  func.func @transform_1(%arg0: i32) -> (i32, i32) {
    %c0_i32 = arith.constant 0 : i32
    %c0_i32_0 = arith.constant 0 : i32
    %c0_i32_1 = arith.constant 0 : i32
    return %c0_i32, %c0_i32_0 : i32, i32
  }
  func.func @transform_2(%arg0: i32) -> (i32, i32) {
    %c0_i32 = arith.constant 0 : i32
    %c0_i32_0 = arith.constant 0 : i32
    %c0_i32_1 = arith.constant 0 : i32
    return %c0_i32, %c0_i32_0 : i32, i32
  }
  func.func @transform_3(%arg0: i32) -> (i32, i32) {
    %c0_i32 = arith.constant 0 : i32
    %c0_i32_0 = arith.constant 0 : i32
    %c0_i32_1 = arith.constant 0 : i32
    return %c0_i32, %c0_i32_0 : i32, i32
  }
  func.func @transform_4(%arg0: i32) -> (i32, i32) {
    %c0_i32 = arith.constant 0 : i32
    %c0_i32_0 = arith.constant 0 : i32
    %c0_i32_1 = arith.constant 0 : i32
    return %c0_i32, %c0_i32_0 : i32, i32
  }
  func.func @transform_5(%arg0: i32) -> (i32, i32) {
    %c0_i32 = arith.constant 0 : i32
    %c0_i32_0 = arith.constant 0 : i32
    return %arg0, %c0_i32 : i32, i32
  }
}

</mosaic_0001>

<llo_original>
// kernel: tpu_custom_call.1
$region0: #{tpu_custom_call.1}
  #allocation0 [shape = 'u32[]', space=smem, size = 0x4, offset = 0x4, fixed_abs, tag = 'smem constant byte address 0x4 - core index']
  #allocation1 [shape = 'u32[144,128]{1,0:T(1,128)}', space=vmem, size = 0x12000, scoped, tag = 'internal scratch']
  %s0 = inlined_call_operand.hbm [shape: f32[16,128], index: 0, kind: input, shape index: {}]
  %s1 = inlined_call_operand.hbm [shape: bf16[128,128], index: 1, kind: input, shape index: {}]
  %s2 = inlined_call_operand.vmem [shape: f32[1,128], index: 2, kind: input, shape index: {}]
  %s3 = inlined_call_operand.hbm [shape: bf16[128,128], index: 3, kind: input, shape index: {}]
  %s4 = inlined_call_operand.vmem [shape: f32[1,128], index: 4, kind: input, shape index: {}]
  %s5 = inlined_call_operand.hbm [shape: f32[16,128], index: 5, kind: output, shape index: {}]
  %s6 = sld [smem:[#allocation0]]
  $region42: #{tpu_custom_call.1} parent=0
    _
  %s8 = ssub.s32 1, %s6
  %s9 = scalar_select 0, %s8, %s6
  $region1: #{tpu_custom_call.1} parent=0
    #allocation2 [shape = 'u8[8192]{0}', space=vmem, size = 0x2000, scoped, tag = 'input window, operand 0, single buffered']
    #allocation3 [shape = 's32[1]{0}', space=sflag, size = 0x4, scoped, tag = 'scoped memory for tpu_custom_call.1']
    #allocation4 [shape = 's32[1]{0}', space=sflag, size = 0x4, scoped, tag = 'scoped memory for tpu_custom_call.1']
    #allocation5 [shape = 'u8[32768]{0}', space=vmem, size = 0x8000, scoped, tag = 'input window, operand 1, single buffered']
    #allocation6 [shape = 's32[1]{0}', space=sflag, size = 0x4, scoped, tag = 'scoped memory for tpu_custom_call.1']
    #allocation7 [shape = 'u8[32768]{0}', space=vmem, size = 0x8000, scoped, tag = 'input window, operand 3, single buffered']
    #allocation8 [shape = 'u8[8192]{0}', space=vmem, size = 0x2000, scoped, tag = 'output window, operand 0, single buffered']
    %10 = vsyncpa [#allocation3], 0
    %11 = vsyncpa [#allocation6], 0
    %12 = vsyncpa [#allocation4], 0
    // Predicated region
    $region2: #{tpu_custom_call.1} parent=1 // pred_check
      _
    $region3: #{tpu_custom_call.1} parent=1 // pred_check_branch
      %14 = sbr.rel (0) target = $region5
    $region4: #{tpu_custom_call.1} parent=1 // pred_region
      %s16 = ssub.s32 256, 256
      %17 = vsyncadd [#allocation3], %s16
      %s18 = sshll.u32 [#allocation2], 4
      %s19 = int_to_ptr.vmem [resolvable:$true] %s18
      %24 = dma.hbm_to_vmem [thread:$0]  %s0, 256, %s19, [#allocation3], 128, 128, 8
    $region5: #{tpu_custom_call.1} parent=1 // pred_fallthru
      _
    // Predicated region
    $region6: #{tpu_custom_call.1} parent=1 // pred_check
      _
    $region7: #{tpu_custom_call.1} parent=1 // pred_check_branch
      %26 = sbr.rel (0) target = $region9
    $region8: #{tpu_custom_call.1} parent=1 // pred_region
      %s28 = ssub.s32 1024, 1024
      %29 = vsyncadd [#allocation6], %s28
      %s30 = sshll.u32 [#allocation5], 4
      %s31 = int_to_ptr.vmem [resolvable:$true] %s30
      %36 = dma.hbm_to_vmem [thread:$0]  %s1, 1024, %s31, [#allocation6], 64, 64, 4
    $region9: #{tpu_custom_call.1} parent=1 // pred_fallthru
      _
    // Predicated region
    $region10: #{tpu_custom_call.1} parent=1 // pred_check
      _
    $region11: #{tpu_custom_call.1} parent=1 // pred_check_branch
      %38 = sbr.rel (0) target = $region13
    $region12: #{tpu_custom_call.1} parent=1 // pred_region
      _
    $region13: #{tpu_custom_call.1} parent=1 // pred_fallthru
      _
    // Predicated region
    $region14: #{tpu_custom_call.1} parent=1 // pred_check
      _
    $region15: #{tpu_custom_call.1} parent=1 // pred_check_branch
      %40 = sbr.rel (0) target = $region17
    $region16: #{tpu_custom_call.1} parent=1 // pred_region
      %s42 = ssub.s32 1024, 1024
      %43 = vsyncadd [#allocation6], %s42
      %s44 = sshll.u32 [#allocation7], 4
      %s45 = int_to_ptr.vmem [resolvable:$true] %s44
      %50 = dma.hbm_to_vmem [thread:$0]  %s3, 1024, %s45, [#allocation6], 64, 64, 4
    $region17: #{tpu_custom_call.1} parent=1 // pred_fallthru
      _
    // Predicated region
    $region18: #{tpu_custom_call.1} parent=1 // pred_check
      _
    $region19: #{tpu_custom_call.1} parent=1 // pred_check_branch
      %52 = sbr.rel (0) target = $region21
    $region20: #{tpu_custom_call.1} parent=1 // pred_region
      _
    $region21: #{tpu_custom_call.1} parent=1 // pred_fallthru
      _
    // Predicated region
    $region22: #{tpu_custom_call.1} parent=1 // pred_check
      _
    $region23: #{tpu_custom_call.1} parent=1 // pred_check_branch
      %54 = sbr.rel (0) target = $region25
    $region24: #{tpu_custom_call.1} parent=1 // pred_region
      %55 = dma.done [#allocation3], 256
    $region25: #{tpu_custom_call.1} parent=1 // pred_fallthru
      _
    // Predicated region
    $region26: #{tpu_custom_call.1} parent=1 // pred_check
      _
    $region27: #{tpu_custom_call.1} parent=1 // pred_check_branch
      %57 = sbr.rel (0) target = $region29
    $region28: #{tpu_custom_call.1} parent=1 // pred_region
      %58 = dma.done [#allocation6], 1024
    $region29: #{tpu_custom_call.1} parent=1 // pred_fallthru
      _
    // Predicated region
    $region30: #{tpu_custom_call.1} parent=1 // pred_check
      _
    $region31: #{tpu_custom_call.1} parent=1 // pred_check_branch
      %60 = sbr.rel (0) target = $region33
    $region32: #{tpu_custom_call.1} parent=1 // pred_region
      %61 = dma.done [#allocation6], 1024
    $region33: #{tpu_custom_call.1} parent=1 // pred_fallthru
      _
    %v67 = vld [vmem:[#allocation2] sm:$0xff]
    %v68 = vld [vmem:[#allocation2 + $0x8] sm:$0xff]
    %v69 = vpack.c.bf16 %v68, %v67
    %v70 = vld [vmem:[#allocation5] sm:$0xf]
    %v71 = vld [vmem:[#allocation5 + $0x4] sm:$0xf]
    %v72 = vld [vmem:[#allocation5 + $0x8] sm:$0xf]
    %v73 = vld [vmem:[#allocation5 + $0xc] sm:$0xf]
    %v74 = vld [vmem:[#allocation5 + $0x10] sm:$0xf]
    %v75 = vld [vmem:[#allocation5 + $0x14] sm:$0xf]
    %v76 = vld [vmem:[#allocation5 + $0x18] sm:$0xf]
    %v77 = vld [vmem:[#allocation5 + $0x1c] sm:$0xf]
    %v78 = vld [vmem:[#allocation5 + $0x20] sm:$0xf]
    %v79 = vld [vmem:[#allocation5 + $0x24] sm:$0xf]
    %v80 = vld [vmem:[#allocation5 + $0x28] sm:$0xf]
    %v81 = vld [vmem:[#allocation5 + $0x2c] sm:$0xf]
    %v82 = vld [vmem:[#allocation5 + $0x30] sm:$0xf]
    %v83 = vld [vmem:[#allocation5 + $0x34] sm:$0xf]
    %v84 = vld [vmem:[#allocation5 + $0x38] sm:$0xf]
    %v85 = vld [vmem:[#allocation5 + $0x3c] sm:$0xf]
    %v86 = vld [vmem:[%s2] sm:$0x1]
    %v88 = vlaneseq
    %v89 = vshrl.u32 %v88, 7
    %v90 = vsub.s32 0, %v89
    %v91 = vrot.slane %v86, %v90
    %v109 = vunpack.c.l.b16 %v70
    %v110 = vunpack.c.l.b16 %v71
    %v111 = vunpack.c.l.b16 %v72
    %v112 = vunpack.c.l.b16 %v73
    %v113 = vunpack.c.l.b16 %v74
    %v114 = vunpack.c.l.b16 %v75
    %v115 = vunpack.c.l.b16 %v76
    %v116 = vunpack.c.l.b16 %v77
    %v117 = vunpack.c.l.b16 %v78
    %v118 = vunpack.c.l.b16 %v79
    %v119 = vunpack.c.l.b16 %v80
    %v120 = vunpack.c.l.b16 %v81
    %v121 = vunpack.c.l.b16 %v82
    %v122 = vunpack.c.l.b16 %v83
    %v123 = vunpack.c.l.b16 %v84
    %v124 = vunpack.c.l.b16 %v85
    %v125 = vpack.c.b16 %v110, %v109
    %v126 = vpack.c.b16 %v112, %v111
    %v127 = vpack.c.b16 %v114, %v113
    %v128 = vpack.c.b16 %v116, %v115
    %v129 = vpack.c.b16 %v118, %v117
    %v130 = vpack.c.b16 %v120, %v119
    %v131 = vpack.c.b16 %v122, %v121
    %v132 = vpack.c.b16 %v124, %v123
    %141 = vmatprep.subr.bf16.mxu0 0
    %142 = vmatpush1.bf16.msra.mxu0 %v132
    %143 = vmatprep.subr.bf16.mxu0 0
    %144 = vmatpush1.bf16.msra.mxu0 %v131
    %145 = vmatprep.subr.bf16.mxu0 0
    %146 = vmatpush1.bf16.msra.mxu0 %v130
    %147 = vmatprep.subr.bf16.mxu0 0
    %148 = vmatpush1.bf16.msra.mxu0 %v129
    %149 = vmatprep.subr.bf16.mxu0 0
    %150 = vmatpush1.bf16.msra.mxu0 %v128
    %151 = vmatprep.subr.bf16.mxu0 0
    %152 = vmatpush1.bf16.msra.mxu0 %v127
    %153 = vmatprep.subr.bf16.mxu0 0
    %154 = vmatpush1.bf16.msra.mxu0 %v126
    %155 = vmatprep.subr.bf16.mxu0 0
    %156 = vmatpush1.bf16.msra.mxu0 %v125
    %157 = vmatprep.subr.bf16.mxu0 0
    %158 = vmatpush2.bf16.msra.mxu0 0
    %159 = vmatprep.subr.bf16.mxu0 0
    %160 = vmatpush2.bf16.msra.mxu0 0
    %161 = vmatprep.subr.bf16.mxu0 0
    %162 = vmatpush2.bf16.msra.mxu0 0
    %163 = vmatprep.subr.bf16.mxu0 0
    %164 = vmatpush2.bf16.msra.mxu0 0
    %165 = vmatprep.subr.bf16.mxu0 0
    %166 = vmatpush2.bf16.msra.mxu0 0
    %167 = vmatprep.subr.bf16.mxu0 0
    %168 = vmatpush2.bf16.msra.mxu0 0
    %169 = vmatprep.subr.bf16.mxu0 0
    %170 = vmatpush2.bf16.msra.mxu0 0
    %171 = vmatprep.subr.bf16.mxu0 0
    %172 = vmatpush2.bf16.msra.mxu0 0
    %173 = vmatprep.mubr.bf16.mxu0 0
    %174 = vmatmul.mubr.bf16.gmra.mxu0 %v69
    %v175 = vpop.f32.mrf.mxu0
    %v176 = vadd.f32 %v91, %v175
    %v177 = vpop.f32.mrf.mxu0
    %v178 = vpop.f32.mrf.mxu0
    %v179 = vadd.f32 %v91, %v178
    %v180 = vpop.f32.mrf.mxu0
    %181 = vdwg.mxu0
    %v182 = vpack.c.bf16 %v179, %v176
    %v183 = vmul.bf16 %v182, 1056980736
    %v184 = vmul.bf16 %v182, %v182
    %v185 = vmul.bf16 %v184, %v182
    %v186 = vmul.bf16 %v185, 1027030327
    %v187 = vadd.bf16 %v182, %v186
    %v188 = vmul.bf16 %v187, 1061961548
    %v189 = vtanh.bf16.pop %v188
    %v190 = vadd.bf16 %v189, 1065369472
    %v191 = vmul.bf16 %v183, %v190
    %v192 = vld [vmem:[#allocation7] sm:$0xf]
    %v193 = vld [vmem:[#allocation7 + $0x4] sm:$0xf]
    %v194 = vld [vmem:[#allocation7 + $0x8] sm:$0xf]
    %v195 = vld [vmem:[#allocation7 + $0xc] sm:$0xf]
    %v196 = vld [vmem:[#allocation7 + $0x10] sm:$0xf]
    %v197 = vld [vmem:[#allocation7 + $0x14] sm:$0xf]
    %v198 = vld [vmem:[#allocation7 + $0x18] sm:$0xf]
    %v199 = vld [vmem:[#allocation7 + $0x1c] sm:$0xf]
    %v200 = vld [vmem:[#allocation7 + $0x20] sm:$0xf]
    %v201 = vld [vmem:[#allocation7 + $0x24] sm:$0xf]
    %v202 = vld [vmem:[#allocation7 + $0x28] sm:$0xf]
    %v203 = vld [vmem:[#allocation7 + $0x2c] sm:$0xf]
    %v204 = vld [vmem:[#allocation7 + $0x30] sm:$0xf]
    %v205 = vld [vmem:[#allocation7 + $0x34] sm:$0xf]
    %v206 = vld [vmem:[#allocation7 + $0x38] sm:$0xf]
    %v207 = vld [vmem:[#allocation7 + $0x3c] sm:$0xf]
    %v208 = vld [vmem:[%s4] sm:$0x1]
    %v210 = vlaneseq
    %v211 = vshrl.u32 %v210, 7
    %v212 = vsub.s32 0, %v211
    %v213 = vrot.slane %v208, %v212
    %v231 = vunpack.c.l.b16 %v192
    %v232 = vunpack.c.l.b16 %v193
    %v233 = vunpack.c.l.b16 %v194
    %v234 = vunpack.c.l.b16 %v195
    %v235 = vunpack.c.l.b16 %v196
    %v236 = vunpack.c.l.b16 %v197
    %v237 = vunpack.c.l.b16 %v198
    %v238 = vunpack.c.l.b16 %v199
    %v239 = vunpack.c.l.b16 %v200
    %v240 = vunpack.c.l.b16 %v201
    %v241 = vunpack.c.l.b16 %v202
    %v242 = vunpack.c.l.b16 %v203
    %v243 = vunpack.c.l.b16 %v204
    %v244 = vunpack.c.l.b16 %v205
    %v245 = vunpack.c.l.b16 %v206
    %v246 = vunpack.c.l.b16 %v207
    %v247 = vpack.c.b16 %v232, %v231
    %v248 = vpack.c.b16 %v234, %v233
    %v249 = vpack.c.b16 %v236, %v235
    %v250 = vpack.c.b16 %v238, %v237
    %v251 = vpack.c.b16 %v240, %v239
    %v252 = vpack.c.b16 %v242, %v241
    %v253 = vpack.c.b16 %v244, %v243
    %v254 = vpack.c.b16 %v246, %v245
    %263 = vmatprep.subr.bf16.mxu0 0
    %264 = vmatpush1.bf16.msra.mxu0 %v254
    %265 = vmatprep.subr.bf16.mxu0 0
    %266 = vmatpush1.bf16.msra.mxu0 %v253
    %267 = vmatprep.subr.bf16.mxu0 0
    %268 = vmatpush1.bf16.msra.mxu0 %v252
    %269 = vmatprep.subr.bf16.mxu0 0
    %270 = vmatpush1.bf16.msra.mxu0 %v251
    %271 = vmatprep.subr.bf16.mxu0 0
    %272 = vmatpush1.bf16.msra.mxu0 %v250
    %273 = vmatprep.subr.bf16.mxu0 0
    %274 = vmatpush1.bf16.msra.mxu0 %v249
    %275 = vmatprep.subr.bf16.mxu0 0
    %276 = vmatpush1.bf16.msra.mxu0 %v248
    %277 = vmatprep.subr.bf16.mxu0 0
    %278 = vmatpush1.bf16.msra.mxu0 %v247
    %279 = vmatprep.subr.bf16.mxu0 0
    %280 = vmatpush2.bf16.msra.mxu0 0
    %281 = vmatprep.subr.bf16.mxu0 0
    %282 = vmatpush2.bf16.msra.mxu0 0
    %283 = vmatprep.subr.bf16.mxu0 0
    %284 = vmatpush2.bf16.msra.mxu0 0
    %285 = vmatprep.subr.bf16.mxu0 0
    %286 = vmatpush2.bf16.msra.mxu0 0
    %287 = vmatprep.subr.bf16.mxu0 0
    %288 = vmatpush2.bf16.msra.mxu0 0
    %289 = vmatprep.subr.bf16.mxu0 0
    %290 = vmatpush2.bf16.msra.mxu0 0
    %291 = vmatprep.subr.bf16.mxu0 0
    %292 = vmatpush2.bf16.msra.mxu0 0
    %293 = vmatprep.subr.bf16.mxu0 0
    %294 = vmatpush2.bf16.msra.mxu0 0
    %295 = vmatprep.mubr.bf16.mxu0 0
    %296 = vmatmul.mubr.bf16.gmra.mxu0 %v191
    %v297 = vpop.f32.mrf.mxu0
    %v298 = vadd.f32 %v213, %v297
    %v299 = vpop.f32.mrf.mxu0
    %v300 = vpop.f32.mrf.mxu0
    %v301 = vadd.f32 %v213, %v300
    %v302 = vpop.f32.mrf.mxu0
    %303 = vdwg.mxu0
    %304 = vst [vmem:[#allocation8] sm:$0xff] %v298
    %305 = vst [vmem:[#allocation8 + $0x8] sm:$0xff] %v301
    // Predicated region
    $region34: #{tpu_custom_call.1} parent=1 // pred_check
      _
    $region35: #{tpu_custom_call.1} parent=1 // pred_check_branch
      %307 = sbr.rel (0) target = $region37
    $region36: #{tpu_custom_call.1} parent=1 // pred_region
      %s309 = ssub.s32 256, 256
      %310 = vsyncadd [#allocation4], %s309
      %s311 = sshll.u32 [#allocation8], 4
      %s312 = int_to_ptr.vmem [resolvable:$true] %s311
      %317 = dma.vmem_to_hbm [thread:$0]  %s312, 256, %s5, [#allocation4], 128, 128, 8
    $region37: #{tpu_custom_call.1} parent=1 // pred_fallthru
      _
    // Predicated region
    $region38: #{tpu_custom_call.1} parent=1 // pred_check
      _
    $region39: #{tpu_custom_call.1} parent=1 // pred_check_branch
      %319 = sbr.rel (0) target = $region41
    $region40: #{tpu_custom_call.1} parent=1 // pred_region
      %320 = dma.done [#allocation4], 256
    $region41: #{tpu_custom_call.1} parent=1 // pred_fallthru
      _
    %321 = vsyncpa [#allocation3], 1
    %322 = vsyncpa [#allocation6], 1
    %323 = vsyncpa [#allocation4], 1

</llo_original>
